<compile_context>
chip_gen: v5e
topology: v5e:2x2
jax: 0.10.0
libtpu: 0.0.40
codegen_flags: <defaults>
</compile_context>

<pallas_src>
import jax
import jax.numpy as jnp
from jax.experimental import pallas as pl
from jax.experimental.pallas import tpu as pltpu

LEAKY_SLOPE = 0.2
_PALLAS_MIN_BATCH = 512                 # below this the fused-XLA path wins (launch overhead)
_TILE_VMEM_BUDGET = 8 * 1024 * 1024     # per-tile activation bytes (double-buffered), safely
                                        # under every chip's scoped-VMEM default


def _leaky_relu(h):
    return jnp.where(h >= 0, h, LEAKY_SLOPE * h)


def _round_up(x, m):
    return ((x + m - 1) // m) * m


def _disc_kernel(x_ref, w1_ref, b1_ref, w2_ref, b2_ref, wc3_ref, bc3_ref, y_ref):
    """(C, N) tile: conv1x1 -> lrelu -> conv1x1 -> lrelu -> folded(conv3 + classifier)."""
    x = x_ref[...].astype(jnp.float32)                       # (dim_in, tile_n), lane-dense

    h = jnp.dot(w1_ref[...], x, preferred_element_type=jnp.float32) + b1_ref[...]
    h = _leaky_relu(h)
    h = jnp.dot(w2_ref[...], h, preferred_element_type=jnp.float32) + b2_ref[...]
    h = _leaky_relu(h)

    # conv3 was folded into the classifier host-side; the remaining (1, dim_h) @ h is
    # done as a VPU multiply + sublane reduce (avoids an M=1 MXU matmul).
    y = jnp.sum(wc3_ref[...] * h, axis=0, keepdims=True) + bc3_ref[0]
    y_ref[...] = y.astype(y_ref.dtype)


def init_params(key, dim_s, dim_a, dtype=jnp.float32):
    """Deterministic PyTorch-style (kaiming-uniform-ish) init for all layers."""
    dim_in = dim_s + dim_a
    dim_h = dim_in * 4
    ks = jax.random.split(key, 8)

    def uni(k, shape, fan_in):
        bound = 1.0 / (fan_in ** 0.5)
        return jax.random.uniform(k, shape, dtype, minval=-bound, maxval=bound)

    # Conv2d weights are (out, in, 1, 1) in torch; store squeezed (out, in).
    return dict(
        w1=uni(ks[0], (dim_h, dim_in), dim_in), b1=uni(ks[1], (dim_h,), dim_in),
        w2=uni(ks[2], (dim_h, dim_h), dim_h),   b2=uni(ks[3], (dim_h,), dim_h),
        w3=uni(ks[4], (dim_h, dim_h), dim_h),   b3=uni(ks[5], (dim_h,), dim_h),
        wc=uni(ks[6], (1, dim_h), dim_h),       bc=uni(ks[7], (1,), dim_h),
    )


@jax.jit
def _forward_pallas(xf, xg, params):
    """Pallas path.  xf: (N, dim_s, 1, 1), xg: (N, dim_a, 1, 1).  Returns (y, x)."""
    N, dim_s, H, W = xf.shape
    _, dim_a, hg, wg = xg.shape
    dim_in = dim_s + dim_a
    dim_h = dim_in * 4
    # classifier Linear(dim_hidden, 1) after view(N, -1) requires H*W == 1 (as in torch).
    assert H * W == 1 and hg == 1 and wg == 1

    # x = cat((xf, xg2), dim=1); with H = W = 1 this is a pure copy of the inputs, so it
    # is built once here, returned as-is, and (transposed once) reused as kernel input.
    x_nc = jnp.concatenate([xf.reshape(N, dim_s), xg.reshape(N, dim_a)], axis=1)
    x_out = x_nc.reshape(N, dim_in, H, W)
    x_cn = x_nc.T                                            # (dim_in, N): batch on lanes

    # Lane tiling: budget-bound tile size (the working set is only ~(dim_in+8)*8 B/lane),
    # even grid so v7x's two TensorCores split the batch evenly.
    n_pad = _round_up(N, 128)
    per_lane_bytes = 4 * 2 * (_round_up(dim_in, 8) + 8)      # x + y blocks, double-buffered
    max_tile = max(128, (_TILE_VMEM_BUDGET // per_lane_bytes) // 128 * 128)
    num_tiles = -(-n_pad // max_tile)
    if num_tiles == 1 and n_pad >= 256:
        num_tiles = 2                                        # keep both v7x cores busy
    elif num_tiles > 2 and num_tiles % 2:
        num_tiles += 1                                       # balanced 2-way core split
    tile_n = _round_up(-(-n_pad // num_tiles), 128)
    n_pad = tile_n * num_tiles
    if n_pad != N:
        x_cn = jnp.pad(x_cn, ((0, 0), (0, n_pad - N)))

    f32 = jnp.float32
    w1 = params["w1"].astype(f32)                            # (dim_h, dim_in)
    b1 = params["b1"].astype(f32).reshape(dim_h, 1)
    w2 = params["w2"].astype(f32)                            # (dim_h, dim_h)
    b2 = params["b2"].astype(f32).reshape(dim_h, 1)
    # Fold conv3 into the classifier (exact: no nonlinearity between them).
    wc3 = (params["wc"].astype(f32) @ params["w3"].astype(f32)).reshape(dim_h, 1)
    bc3 = (params["b3"].astype(f32) @ params["wc"].astype(f32).reshape(dim_h)
           + params["bc"].astype(f32))                       # (1,)

    resident = lambda i: (0, 0)                              # weights stay in VMEM
    flops = 2 * n_pad * (dim_in * dim_h + dim_h * dim_h + dim_h)
    bytes_accessed = 4 * (n_pad * (dim_in + 1)
                          + dim_h * (dim_in + dim_h + 3) + 1)

    y_cn = pl.pallas_call(
        _disc_kernel,
        out_shape=jax.ShapeDtypeStruct((1, n_pad), x_nc.dtype),   # lane-dense y
        grid=(num_tiles,),
        in_specs=[
            pl.BlockSpec((dim_in, tile_n), lambda i: (0, i)),     # x (C, N) tile
            pl.BlockSpec((dim_h, dim_in), resident),              # w1
            pl.BlockSpec((dim_h, 1), resident),                   # b1
            pl.BlockSpec((dim_h, dim_h), resident),               # w2
            pl.BlockSpec((dim_h, 1), resident),                   # b2
            pl.BlockSpec((dim_h, 1), resident),                   # (wc @ w3)^T column
            pl.BlockSpec((1,), lambda i: (0,),
                         memory_space=pltpu.MemorySpace.SMEM),    # folded scalar bias
        ],
        out_specs=pl.BlockSpec((1, tile_n), lambda i: (0, i)),
        compiler_params=pltpu.CompilerParams(
            dimension_semantics=("parallel",),
            vmem_limit_bytes=32 << 20),
        cost_estimate=pl.CostEstimate(
            flops=flops, transcendentals=0, bytes_accessed=bytes_accessed),
    )(x_cn, w1, b1, w2, b2, wc3, bc3)

    y = y_cn[:, :N].T                                        # (N, 1)
    return y, x_out


@jax.jit
def _forward_xla(xf, xg, params):
    """Fused-XLA fallback for small batches (same math, 1x1 maps)."""
    N, dim_s, H, W = xf.shape
    _, dim_a = xg.shape[:2]
    assert H * W == 1
    x_nc = jnp.concatenate([xf.reshape(N, dim_s), xg.reshape(N, dim_a)], axis=1)
    h = _leaky_relu(x_nc @ params["w1"].T + params["b1"])
    h = _leaky_relu(h @ params["w2"].T + params["b2"])
    h = h @ params["w3"].T + params["b3"]
    y = h @ params["wc"].T + params["bc"]
    return y, x_nc.reshape(N, dim_s + dim_a, H, W)


def appearance_compatibility_discriminator(xf, xg, params, use_pallas=None):
    """Forward pass matching the PyTorch module.  Returns (y, x)."""
    if use_pallas is None:
        use_pallas = xf.shape[0] >= _PALLAS_MIN_BATCH
    fwd = _forward_pallas if use_pallas else _forward_xla
    return fwd(xf, xg, params)


def _reference(xf, xg, params):
    """Pure-JAX reference of the PyTorch forward for validation."""
    N, dim_s, H, W = xf.shape
    xg2 = jnp.tile(xg, (1, 1, H, W))
    x = jnp.concatenate([xf, xg2], axis=1)                   # (N, C, 1, 1)
    v = x.reshape(N, -1)
    h = v @ params["w1"].T + params["b1"]
    h = jnp.where(h >= 0, h, LEAKY_SLOPE * h)
    h = h @ params["w2"].T + params["b2"]
    h = jnp.where(h >= 0, h, LEAKY_SLOPE * h)
    h = h @ params["w3"].T + params["b3"]
    y = h @ params["wc"].T + params["bc"]
    return y, x


if __name__ == "__main__":
    dim_s, dim_a = 4, 4            # args.dim_enc_s / args.dim_enc_a
    key = jax.random.PRNGKey(0)
    k_xf, k_xg, k_p, k_xf2, k_xg2 = jax.random.split(key, 5)
    params = init_params(k_p, dim_s, dim_a)

    # Small shape matching the module's 1x1-map constraint; force the Pallas path so
    # the kernel (and its padding path: N=2 -> 128 lanes) is exercised.
    N, H, W = 2, 1, 1
    xf = jax.random.normal(k_xf, (N, dim_s, H, W), jnp.float32)
    xg = jax.random.normal(k_xg, (N, dim_a, 1, 1), jnp.float32)
    y, x = appearance_compatibility_discriminator(xf, xg, params, use_pallas=True)
    jax.block_until_ready((y, x))
    y_ref, x_ref = _reference(xf, xg, params)
    assert y.shape == (N, 1) and x.shape == (N, dim_s + dim_a, H, W)
    assert jnp.allclose(y, y_ref, atol=1e-4, rtol=1e-4)
    assert jnp.allclose(x, x_ref, atol=0, rtol=0)

    # Auto-dispatch at small N takes the fused-XLA path (kernel overhead not worth it).
    y_s, x_s = appearance_compatibility_discriminator(xf, xg, params)
    jax.block_until_ready((y_s, x_s))
    assert jnp.allclose(y_s, y_ref, atol=1e-4, rtol=1e-4)
    assert jnp.allclose(x_s, x_ref, atol=1e-6, rtol=1e-6)

    # Larger batch: auto-dispatches to the Pallas kernel with a balanced 2-tile grid
    # (no pad waste; both v7x TensorCores get equal work).
    N2 = 2304
    xf2 = jax.random.normal(k_xf2, (N2, dim_s, 1, 1), jnp.float32)
    xg2 = jax.random.normal(k_xg2, (N2, dim_a, 1, 1), jnp.float32)
    y2, x2 = appearance_compatibility_discriminator(xf2, xg2, params)
    jax.block_until_ready((y2, x2))
    y2_ref, x2_ref = _reference(xf2, xg2, params)
    assert jnp.allclose(y2, y2_ref, atol=1e-4, rtol=1e-4)
    assert jnp.allclose(x2, x2_ref, atol=0, rtol=0)

    print("KERNEL_OK")
</pallas_src>

<mosaic_0001>
module attributes {stable_mosaic.version = 11 : i64} {
  func.func @_disc_kernel(%arg0: i32, %arg1: memref<8x128xf32, #tpu.memory_space<vmem>>, %arg2: memref<32x8xf32, #tpu.memory_space<vmem>>, %arg3: memref<32x1xf32, #tpu.memory_space<vmem>>, %arg4: memref<32x32xf32, #tpu.memory_space<vmem>>, %arg5: memref<32x1xf32, #tpu.memory_space<vmem>>, %arg6: memref<32x1xf32, #tpu.memory_space<vmem>>, %arg7: memref<1xf32, #tpu.memory_space<smem>>, %arg8: memref<1x128xf32, #tpu.memory_space<vmem>>) attributes {dimension_semantics = [#tpu.dimension_semantics<parallel>], iteration_bounds = array<i64: 1>, scalar_prefetch = 0 : i64, scratch_operands = 0 : i64, tpu.core_type = #tpu.core_type<tc>, window_params = [{transform_indices = @transform_0, window_bounds = array<i64: 8, 128>}, {pipeline_mode = #tpu.pipeline_mode<synchronous>, transform_indices = @transform_1, window_bounds = array<i64: 32, 8>}, {pipeline_mode = #tpu.pipeline_mode<synchronous>, transform_indices = @transform_2, window_bounds = array<i64: 32, 1>}, {pipeline_mode = #tpu.pipeline_mode<synchronous>, transform_indices = @transform_3, window_bounds = array<i64: 32, 32>}, {pipeline_mode = #tpu.pipeline_mode<synchronous>, transform_indices = @transform_4, window_bounds = array<i64: 32, 1>}, {pipeline_mode = #tpu.pipeline_mode<synchronous>, transform_indices = @transform_5, window_bounds = array<i64: 32, 1>}, {transform_indices = @transform_6, window_bounds = array<i64: 1>}, {transform_indices = @transform_7, window_bounds = array<i64: 1, 128>}]} {
    %c0 = arith.constant 0 : index
    %c0_0 = arith.constant 0 : index
    %0 = vector.load %arg1[%c0, %c0_0] : memref<8x128xf32, #tpu.memory_space<vmem>>, vector<8x128xf32>
    %c0_1 = arith.constant 0 : index
    %c0_2 = arith.constant 0 : index
    %1 = vector.load %arg2[%c0_1, %c0_2] : memref<32x8xf32, #tpu.memory_space<vmem>>, vector<32x8xf32>
    %cst = arith.constant dense<0.000000e+00> : vector<32x128xf32>
    %2 = tpu.matmul %1, %0, %cst {dimension_numbers = #tpu.dot_dimension_numbers<[1], [0], [0], [1], [0, 0, 1, 1], [], []>} : vector<32x8xf32>, vector<8x128xf32>, vector<32x128xf32> -> vector<32x128xf32>
    %c0_3 = arith.constant 0 : index
    %c0_4 = arith.constant 0 : index
    %3 = vector.load %arg3[%c0_3, %c0_4] : memref<32x1xf32, #tpu.memory_space<vmem>>, vector<32x1xf32>
    %4 = vector.broadcast %3 : vector<32x1xf32> to vector<32x128xf32>
    %5 = arith.addf %2, %4 : vector<32x128xf32>
    %cst_5 = arith.constant 0.000000e+00 : f32
    %6 = vector.broadcast %cst_5 : f32 to vector<32x128xf32>
    %7 = arith.cmpf oge, %5, %6 : vector<32x128xf32>
    %cst_6 = arith.constant 2.000000e-01 : f32
    %8 = vector.broadcast %cst_6 : f32 to vector<32x128xf32>
    %9 = arith.mulf %8, %5 : vector<32x128xf32>
    %10 = arith.select %7, %5, %9 : vector<32x128xi1>, vector<32x128xf32>
    %c0_7 = arith.constant 0 : index
    %c0_8 = arith.constant 0 : index
    %11 = vector.load %arg4[%c0_7, %c0_8] : memref<32x32xf32, #tpu.memory_space<vmem>>, vector<32x32xf32>
    %cst_9 = arith.constant dense<0.000000e+00> : vector<32x128xf32>
    %12 = tpu.matmul %11, %10, %cst_9 {dimension_numbers = #tpu.dot_dimension_numbers<[1], [0], [0], [1], [0, 0, 1, 1], [], []>} : vector<32x32xf32>, vector<32x128xf32>, vector<32x128xf32> -> vector<32x128xf32>
    %c0_10 = arith.constant 0 : index
    %c0_11 = arith.constant 0 : index
    %13 = vector.load %arg5[%c0_10, %c0_11] : memref<32x1xf32, #tpu.memory_space<vmem>>, vector<32x1xf32>
    %14 = vector.broadcast %13 : vector<32x1xf32> to vector<32x128xf32>
    %15 = arith.addf %12, %14 : vector<32x128xf32>
    %cst_12 = arith.constant 0.000000e+00 : f32
    %16 = vector.broadcast %cst_12 : f32 to vector<32x128xf32>
    %17 = arith.cmpf oge, %15, %16 : vector<32x128xf32>
    %cst_13 = arith.constant 2.000000e-01 : f32
    %18 = vector.broadcast %cst_13 : f32 to vector<32x128xf32>
    %19 = arith.mulf %18, %15 : vector<32x128xf32>
    %20 = arith.select %17, %15, %19 : vector<32x128xi1>, vector<32x128xf32>
    %c0_14 = arith.constant 0 : index
    %c0_15 = arith.constant 0 : index
    %21 = vector.load %arg6[%c0_14, %c0_15] : memref<32x1xf32, #tpu.memory_space<vmem>>, vector<32x1xf32>
    %22 = vector.broadcast %21 : vector<32x1xf32> to vector<32x128xf32>
    %23 = arith.mulf %22, %20 : vector<32x128xf32>
    %cst_16 = arith.constant dense<0.000000e+00> : vector<128xf32>
    %24 = vector.multi_reduction <add>, %23, %cst_16 [0] : vector<32x128xf32> to vector<128xf32>
    %25 = vector.shape_cast %24 : vector<128xf32> to vector<1x128xf32>
    %c0_17 = arith.constant 0 : index
    %26 = memref.load %arg7[%c0_17] : memref<1xf32, #tpu.memory_space<smem>>
    %27 = vector.broadcast %26 : f32 to vector<1x128xf32>
    %28 = arith.addf %25, %27 : vector<1x128xf32>
    %c0_18 = arith.constant 0 : index
    %c0_19 = arith.constant 0 : index
    %29 = vector.load %arg8[%c0_18, %c0_19] : memref<1x128xf32, #tpu.memory_space<vmem>>, vector<1x128xf32>
    tpu.vector_store %arg8[%c0_18, %c0_19], %28 {strides = array<i32>} : memref<1x128xf32, #tpu.memory_space<vmem>>, vector<1x128xf32>,
    return
  }
  func.func @transform_0(%arg0: i32) -> (i32, i32) {
    %c0_i32 = arith.constant 0 : i32
    %c0_i32_0 = arith.constant 0 : i32
    return %c0_i32, %arg0 : i32, i32
  }
  func.func @transform_1(%arg0: i32) -> (i32, i32) {
    %c0_i32 = arith.constant 0 : i32
    %c0_i32_0 = arith.constant 0 : i32
    %c0_i32_1 = arith.constant 0 : i32
    return %c0_i32, %c0_i32_0 : i32, i32
  }
  func.func @transform_2(%arg0: i32) -> (i32, i32) {
    %c0_i32 = arith.constant 0 : i32
    %c0_i32_0 = arith.constant 0 : i32
    %c0_i32_1 = arith.constant 0 : i32
    return %c0_i32, %c0_i32_0 : i32, i32
  }
  func.func @transform_3(%arg0: i32) -> (i32, i32) {
    %c0_i32 = arith.constant 0 : i32
    %c0_i32_0 = arith.constant 0 : i32
    %c0_i32_1 = arith.constant 0 : i32
    return %c0_i32, %c0_i32_0 : i32, i32
  }
  func.func @transform_4(%arg0: i32) -> (i32, i32) {
    %c0_i32 = arith.constant 0 : i32
    %c0_i32_0 = arith.constant 0 : i32
    %c0_i32_1 = arith.constant 0 : i32
    return %c0_i32, %c0_i32_0 : i32, i32
  }
  func.func @transform_5(%arg0: i32) -> (i32, i32) {
    %c0_i32 = arith.constant 0 : i32
    %c0_i32_0 = arith.constant 0 : i32
    %c0_i32_1 = arith.constant 0 : i32
    return %c0_i32, %c0_i32_0 : i32, i32
  }
  func.func @transform_6(%arg0: i32) -> i32 {
    %c0_i32 = arith.constant 0 : i32
    %c0_i32_0 = arith.constant 0 : i32
    return %c0_i32 : i32
  }
  func.func @transform_7(%arg0: i32) -> (i32, i32) {
    %c0_i32 = arith.constant 0 : i32
    %c0_i32_0 = arith.constant 0 : i32
    return %c0_i32, %arg0 : i32, i32
  }
}

</mosaic_0001>

<llo_original>
// kernel: _forward_pallas.1
$region0: #{_forward_pallas.1}
  #allocation0 [shape = 'u32[]', space=smem, size = 0x4, offset = 0x4, fixed_abs, tag = 'smem constant byte address 0x4 - core index']
  #allocation1 [shape = 'u32[72,128]{1,0:T(1,128)}', space=vmem, size = 0x9000, scoped, tag = 'internal scratch']
  #allocation2 [shape = 'f32[1]{0:T(128)S(6)}', space=smem, size = 0x200, scoped, tag = 'scoped memory for _forward_pallas.1']
  %s0 = inlined_call_operand.vmem [shape: f32[8,128], index: 0, kind: input, shape index: {}]
  %s1 = inlined_call_operand.vmem [shape: f32[32,8], index: 1, kind: input, shape index: {}]
  %s2 = inlined_call_operand.vmem [shape: f32[32,1], index: 2, kind: input, shape index: {}]
  %s3 = inlined_call_operand.vmem [shape: f32[32,32], index: 3, kind: input, shape index: {}]
  %s4 = inlined_call_operand.vmem [shape: f32[32,1], index: 4, kind: input, shape index: {}]
  %s5 = inlined_call_operand.vmem [shape: f32[32,1], index: 5, kind: input, shape index: {}]
  %s6 = inlined_call_operand.<no memory space> [shape: f32[1], index: 6, kind: input, shape index: {}]
  %s7 = inlined_call_operand.vmem [shape: f32[1,128], index: 7, kind: output, shape index: {}]
  %s8 = sld [smem:[#allocation0]]
  $region38: #{_forward_pallas.1} parent=0
    _
  %s10 = ssub.s32 1, %s8
  %s11 = scalar_select 0, %s10, %s8
  %12 = sst [smem:[#allocation2]] %s6
  // Predicated region
  $region2: #{_forward_pallas.1} parent=0 // pred_check
    _
  $region3: #{_forward_pallas.1} parent=0 // pred_check_branch
    %14 = sbr.rel (0) target = $region5
  $region4: #{_forward_pallas.1} parent=0 // pred_region
    _
  $region5: #{_forward_pallas.1} parent=0 // pred_fallthru
    _
  // Predicated region
  $region6: #{_forward_pallas.1} parent=0 // pred_check
    _
  $region7: #{_forward_pallas.1} parent=0 // pred_check_branch
    %16 = sbr.rel (0) target = $region9
  $region8: #{_forward_pallas.1} parent=0 // pred_region
    _
  $region9: #{_forward_pallas.1} parent=0 // pred_fallthru
    _
  // Predicated region
  $region10: #{_forward_pallas.1} parent=0 // pred_check
    _
  $region11: #{_forward_pallas.1} parent=0 // pred_check_branch
    %18 = sbr.rel (0) target = $region13
  $region12: #{_forward_pallas.1} parent=0 // pred_region
    _
  $region13: #{_forward_pallas.1} parent=0 // pred_fallthru
    _
  // Predicated region
  $region14: #{_forward_pallas.1} parent=0 // pred_check
    _
  $region15: #{_forward_pallas.1} parent=0 // pred_check_branch
    %20 = sbr.rel (0) target = $region17
  $region16: #{_forward_pallas.1} parent=0 // pred_region
    _
  $region17: #{_forward_pallas.1} parent=0 // pred_fallthru
    _
  // Predicated region
  $region18: #{_forward_pallas.1} parent=0 // pred_check
    _
  $region19: #{_forward_pallas.1} parent=0 // pred_check_branch
    %22 = sbr.rel (0) target = $region21
  $region20: #{_forward_pallas.1} parent=0 // pred_region
    _
  $region21: #{_forward_pallas.1} parent=0 // pred_fallthru
    _
  // Predicated region
  $region22: #{_forward_pallas.1} parent=0 // pred_check
    _
  $region23: #{_forward_pallas.1} parent=0 // pred_check_branch
    %24 = sbr.rel (0) target = $region25
  $region24: #{_forward_pallas.1} parent=0 // pred_region
    _
  $region25: #{_forward_pallas.1} parent=0 // pred_fallthru
    _
  // Predicated region
  $region26: #{_forward_pallas.1} parent=0 // pred_check
    _
  $region27: #{_forward_pallas.1} parent=0 // pred_check_branch
    %26 = sbr.rel (0) target = $region29
  $region28: #{_forward_pallas.1} parent=0 // pred_region
    _
  $region29: #{_forward_pallas.1} parent=0 // pred_fallthru
    _
  %v27 = vld [vmem:[%s0] sm:$0xff]
  %v28 = vld [vmem:[%s1] sm:$0xff]
  %v29 = vld [vmem:[%s1 + $0x8] sm:$0xff]
  %v30 = vld [vmem:[%s1 + $0x10] sm:$0xff]
  %v31 = vld [vmem:[%s1 + $0x18] sm:$0xff]
  %v32 = vld [vmem:[%s2] sm:$0xff]
  %v33 = vld [vmem:[%s2 + $0x8] sm:$0xff]
  %v34 = vld [vmem:[%s2 + $0x10] sm:$0xff]
  %v35 = vld [vmem:[%s2 + $0x18] sm:$0xff]
  %37 = vset.pattern.permute.xlu0 0
  %38 = vperm.xlu0 %37, %v32
  %v39 = vpop.permute.xlu0 %38
  %42 = vset.pattern.permute.xlu0 0
  %43 = vperm.xlu0 %42, %v33
  %v44 = vpop.permute.xlu0 %43
  %47 = vset.pattern.permute.xlu0 0
  %48 = vperm.xlu0 %47, %v34
  %v49 = vpop.permute.xlu0 %48
  %52 = vset.pattern.permute.xlu0 0
  %53 = vperm.xlu0 %52, %v35
  %v54 = vpop.permute.xlu0 %53
  %vm56 = vcmask 64512
  %v58 = vsel %vm56, %v28, 0
  %v61 = vsel %vm56, %v29, 0
  %v64 = vsel %vm56, %v30, 0
  %v67 = vsel %vm56, %v31, 0
  %69 = vmatpush.msra.mxu0 0.0
  %70 = vmatpush.msra.mxu0 0.0
  %71 = vmatpush.msra.mxu0 0.0
  %72 = vmatpush.msra.mxu0 0.0
  %73 = vmatpush.msra.mxu0 0.0
  %74 = vmatpush.msra.mxu0 0.0
  %75 = vmatpush.msra.mxu0 0.0
  %76 = vmatpush.msra.mxu0 0.0
  %77 = vmatpush.msra.mxu0 0.0
  %78 = vmatpush.msra.mxu0 0.0
  %79 = vmatpush.msra.mxu0 0.0
  %80 = vmatpush.msra.mxu0 0.0
  %81 = vmatpush.msra.mxu0 0.0
  %82 = vmatpush.msra.mxu0 0.0
  %83 = vmatpush.msra.mxu0 0.0
  %84 = vmatpush.msra.mxu0 %v27
  %85 = vmatmul.f32.gmra.mxu0 %v58
  %v86 = vpop.f32.mrf.mxu0
  %v87 = vadd.f32 %v39, %v86
  %88 = vmatmul.f32.gmra.mxu0 %v61
  %v89 = vpop.f32.mrf.mxu0
  %v90 = vadd.f32 %v44, %v89
  %91 = vmatmul.f32.gmra.mxu0 %v64
  %v92 = vpop.f32.mrf.mxu0
  %v93 = vadd.f32 %v49, %v92
  %94 = vmatmul.f32.gmra.mxu0 %v67
  %v95 = vpop.f32.mrf.mxu0
  %v96 = vadd.f32 %v54, %v95
  %97 = vdwg.mxu0
  %vm98 = vcmp.ge.f32.partialorder %v87, 0.0
  %vm99 = vcmp.ge.f32.partialorder %v90, 0.0
  %vm100 = vcmp.ge.f32.partialorder %v93, 0.0
  %vm101 = vcmp.ge.f32.partialorder %v96, 0.0
  %v102 = vmul.f32 %v87, 0.2
  %v103 = vmul.f32 %v90, 0.2
  %v104 = vmul.f32 %v93, 0.2
  %v105 = vmul.f32 %v96, 0.2
  %v106 = vsel %vm98, %v87, %v102
  %v107 = vsel %vm99, %v90, %v103
  %v108 = vsel %vm100, %v93, %v104
  %v109 = vsel %vm101, %v96, %v105
  %v110 = vld [vmem:[%s3] sm:$0xff]
  %v111 = vld [vmem:[%s3 + $0x8] sm:$0xff]
  %v112 = vld [vmem:[%s3 + $0x10] sm:$0xff]
  %v113 = vld [vmem:[%s3 + $0x18] sm:$0xff]
  %v114 = vld [vmem:[%s4] sm:$0xff]
  %v115 = vld [vmem:[%s4 + $0x8] sm:$0xff]
  %v116 = vld [vmem:[%s4 + $0x10] sm:$0xff]
  %v117 = vld [vmem:[%s4 + $0x18] sm:$0xff]
  %119 = vset.pattern.permute.xlu0 0
  %120 = vperm.xlu0 %119, %v114
  %v121 = vpop.permute.xlu0 %120
  %124 = vset.pattern.permute.xlu0 0
  %125 = vperm.xlu0 %124, %v115
  %v126 = vpop.permute.xlu0 %125
  %129 = vset.pattern.permute.xlu0 0
  %130 = vperm.xlu0 %129, %v116
  %v131 = vpop.permute.xlu0 %130
  %134 = vset.pattern.permute.xlu0 0
  %135 = vperm.xlu0 %134, %v117
  %v136 = vpop.permute.xlu0 %135
  %vm138 = vcmask 261120
  %v140 = vsel %vm138, %v110, 0
  %v143 = vsel %vm138, %v111, 0
  %v146 = vsel %vm138, %v112, 0
  %v149 = vsel %vm138, %v113, 0
  %151 = vmatpush.msra.mxu0 0.0
  %152 = vmatpush.msra.mxu0 0.0
  %153 = vmatpush.msra.mxu0 0.0
  %154 = vmatpush.msra.mxu0 0.0
  %155 = vmatpush.msra.mxu0 0.0
  %156 = vmatpush.msra.mxu0 0.0
  %157 = vmatpush.msra.mxu0 0.0
  %158 = vmatpush.msra.mxu0 0.0
  %159 = vmatpush.msra.mxu0 0.0
  %160 = vmatpush.msra.mxu0 0.0
  %161 = vmatpush.msra.mxu0 0.0
  %162 = vmatpush.msra.mxu0 0.0
  %163 = vmatpush.msra.mxu0 %v109
  %164 = vmatpush.msra.mxu0 %v108
  %165 = vmatpush.msra.mxu0 %v107
  %166 = vmatpush.msra.mxu0 %v106
  %167 = vmatmul.f32.gmra.mxu0 %v140
  %v168 = vpop.f32.mrf.mxu0
  %v169 = vadd.f32 %v121, %v168
  %170 = vmatmul.f32.gmra.mxu0 %v143
  %v171 = vpop.f32.mrf.mxu0
  %v172 = vadd.f32 %v126, %v171
  %173 = vmatmul.f32.gmra.mxu0 %v146
  %v174 = vpop.f32.mrf.mxu0
  %v175 = vadd.f32 %v131, %v174
  %176 = vmatmul.f32.gmra.mxu0 %v149
  %v177 = vpop.f32.mrf.mxu0
  %v178 = vadd.f32 %v136, %v177
  %179 = vdwg.mxu0
  %vm180 = vcmp.ge.f32.partialorder %v169, 0.0
  %vm181 = vcmp.ge.f32.partialorder %v172, 0.0
  %vm182 = vcmp.ge.f32.partialorder %v175, 0.0
  %vm183 = vcmp.ge.f32.partialorder %v178, 0.0
  %v184 = vmul.f32 %v169, 0.2
  %v185 = vmul.f32 %v172, 0.2
  %v186 = vmul.f32 %v175, 0.2
  %v187 = vmul.f32 %v178, 0.2
  %v188 = vsel %vm180, %v169, %v184
  %v189 = vsel %vm181, %v172, %v185
  %v190 = vsel %vm182, %v175, %v186
  %v191 = vsel %vm183, %v178, %v187
  %v192 = vld [vmem:[%s5] sm:$0xff]
  %v193 = vld [vmem:[%s5 + $0x8] sm:$0xff]
  %v194 = vld [vmem:[%s5 + $0x10] sm:$0xff]
  %v195 = vld [vmem:[%s5 + $0x18] sm:$0xff]
  %197 = vset.pattern.permute.xlu0 0
  %198 = vperm.xlu0 %197, %v192
  %v199 = vpop.permute.xlu0 %198
  %202 = vset.pattern.permute.xlu0 0
  %203 = vperm.xlu0 %202, %v193
  %v204 = vpop.permute.xlu0 %203
  %207 = vset.pattern.permute.xlu0 0
  %208 = vperm.xlu0 %207, %v194
  %v209 = vpop.permute.xlu0 %208
  %212 = vset.pattern.permute.xlu0 0
  %213 = vperm.xlu0 %212, %v195
  %v214 = vpop.permute.xlu0 %213
  %v216 = vmul.f32 %v199, %v188
  %v217 = vmul.f32 %v204, %v189
  %v218 = vmul.f32 %v209, %v190
  %v219 = vmul.f32 %v214, %v191
  %v220 = vadd.f32 %v216, %v217
  %v221 = vadd.f32 %v220, %v218
  %v222 = vadd.f32 %v221, %v219
  %v223 = vrot.slane %v222, 4
  %v224 = vadd.f32 %v222, %v223
  %v225 = vrot.slane %v224, 2
  %v226 = vadd.f32 %v224, %v225
  %v227 = vrot.slane %v226, 1
  %v228 = vadd.f32 %v226, %v227
  %s229 = sld [smem:[#allocation2]]
  %v230 = vstv %s229
  %v231 = vadd.f32 %v228, %v230
  %232 = vst [vmem:[%s7] sm:$0x1] %v231
  // Predicated region
  $region30: #{_forward_pallas.1} parent=0 // pred_check
    _
  $region31: #{_forward_pallas.1} parent=0 // pred_check_branch
    %234 = sbr.rel (0) target = $region33
  $region32: #{_forward_pallas.1} parent=0 // pred_region
    _
  $region33: #{_forward_pallas.1} parent=0 // pred_fallthru
    _
  // Predicated region
  $region34: #{_forward_pallas.1} parent=0 // pred_check
    _
  $region35: #{_forward_pallas.1} parent=0 // pred_check_branch
    %236 = sbr.rel (0) target = $region37
  $region36: #{_forward_pallas.1} parent=0 // pred_region
    _
  $region37: #{_forward_pallas.1} parent=0 // pred_fallthru
    _

</llo_original>
